<compile_context>
chip_gen: v5e
topology: v5e:2x2
jax: 0.10.0
libtpu: 0.0.40
codegen_flags: <defaults>
</compile_context>

<pallas_src>
from functools import partial

import jax
import jax.numpy as jnp
from jax import lax
from jax.experimental import pallas as pl
from jax.experimental.pallas import tpu as pltpu

ALPHA = 0.5       # snn.Synaptic(alpha=0.5)
BETA = 0.5        # snn.Synaptic(beta=0.5)
THRESHOLD = 1.0   # snnTorch default threshold
LANE = 128        # TPU lane width
CHUNK = 8         # timesteps per coalesced store (8 sublanes)


def _synaptic_net_kernel(x_ref, w_ref, b_ref, spk_ref, mem_ref,
                         syn_state, mem_state):
    """One grid step = one tile of the folded (T*B) axis.

    x_ref:  [rows_tile, in_f]      dense input tile (no lane padding)
    w_ref:  [in_f, out_pad]        fc1 weight (lane-padded)
    b_ref:  [1, out_pad]           fc1 bias (lane-padded)
    spk_ref/mem_ref: [rows_tile, out_pad] output tiles
    syn_state/mem_state: [B, out_pad] VMEM scratch, carried across grid steps.
    """
    rows, out_pad = spk_ref.shape
    B = syn_state.shape[0]
    in_f = x_ref.shape[1]
    n_chunks = rows // (CHUNK * B)          # static

    # init_hidden=True -> zero state before the first timestep tile.
    @pl.when(pl.program_id(0) == 0)
    def _():
        syn_state[...] = jnp.zeros_like(syn_state)
        mem_state[...] = jnp.zeros_like(mem_state)

    w_row = w_ref[...]                                           # [in_f, out_pad]
    # Hoisted broadcast (JAX does not CSE broadcast_in_dim inside the loop).
    b_blk = jnp.broadcast_to(b_ref[...], (CHUNK * B, out_pad))   # [8B, out_pad]

    def chunk_step(c, carry):
        syn, mem = carry                                         # each [B, out_pad]
        base = pl.multiple_of(c * (CHUNK * B), CHUNK * B)

        # fc1 for 8 timesteps at once on the VPU (no MXU, no K padding).
        x_blk = x_ref[pl.ds(base, CHUNK * B), :]                 # [8B, in_f]
        cur_blk = b_blk
        for k in range(in_f):                                    # in_f is tiny (1)
            cur_blk = cur_blk + x_blk[:, k:k + 1] * w_row[k:k + 1, :]

        # Unrolled 8-step Synaptic recurrence; syn/mem stay in vregs.
        spk_rows, mem_rows = [], []
        for i in range(CHUNK):
            cur = cur_blk[i * B:(i + 1) * B, :]                  # [B, out_pad]
            reset = (mem > THRESHOLD).astype(jnp.float32)        # from mem_{t-1}
            syn = ALPHA * syn + cur
            mem = BETA * mem + syn - reset * THRESHOLD
            spk = (mem > THRESHOLD).astype(jnp.float32)
            spk_rows.append(spk)
            mem_rows.append(mem)

        # Coalesced full-sublane, lane-dense stores (one vst tile per chunk).
        spk_ref[pl.ds(base, CHUNK * B), :] = jnp.concatenate(spk_rows, axis=0)
        mem_ref[pl.ds(base, CHUNK * B), :] = jnp.concatenate(mem_rows, axis=0)
        return syn, mem

    syn_f, mem_f = lax.fori_loop(0, n_chunks, chunk_step,
                                 (syn_state[...], mem_state[...]),
                                 unroll=(n_chunks <= 2))
    syn_state[...] = syn_f
    mem_state[...] = mem_f


@partial(jax.jit, static_argnames=("t_tile",))
def net_forward(x_seq, w, b, *, t_tile=None):
    """Fused multi-timestep forward of the spec's Net.

    x_seq: [T, B, in_features] f32   (T repeated calls of Net.forward)
    w:     [out_features, in_features]  (PyTorch nn.Linear layout)
    b:     [out_features]
    t_tile: timesteps per grid step (None -> auto ~1024 rows per tile).
    Returns (spk, mem), each [T, B, out_features]; step t matches the t-th
    sequential call of the stateful PyTorch module starting from zero state.
    """
    T, B, in_f = x_seq.shape
    out_f = w.shape[0]
    out_pad = pl.cdiv(out_f, LANE) * LANE

    # Choose a time-tile: multiple of CHUNK, ~1024 rows per grid step.
    if t_tile is None:
        t_tile = max(CHUNK, ((1024 // max(B, 1)) // CHUNK) * CHUNK)
    t_tile = max(CHUNK, (t_tile // CHUNK) * CHUNK)
    t_tile = min(t_tile, pl.cdiv(T, CHUNK) * CHUNK)
    T_pad = pl.cdiv(T, t_tile) * t_tile
    n_tiles = T_pad // t_tile
    rows_tile = t_tile * B

    # Dense (unpadded-lane) input; only pad trailing timesteps with zeros.
    x_flat = jnp.zeros((T_pad * B, in_f), jnp.float32)
    x_flat = x_flat.at[:T * B].set(x_seq.reshape(T * B, in_f).astype(jnp.float32))
    # Lane-pad W / b to 128 so the recurrence and stores are lane-dense.
    w_pad = jnp.zeros((in_f, out_pad), jnp.float32)
    w_pad = w_pad.at[:, :out_f].set(w.T.astype(jnp.float32))
    b_pad = jnp.zeros((1, out_pad), jnp.float32)
    b_pad = b_pad.at[:, :out_f].set(b.reshape(1, out_f).astype(jnp.float32))

    grid_spec = pltpu.PrefetchScalarGridSpec(
        num_scalar_prefetch=0,
        grid=(n_tiles,),
        in_specs=[
            pl.BlockSpec((rows_tile, in_f), lambda g: (g, 0)),
            pl.BlockSpec((in_f, out_pad), lambda g: (0, 0)),
            pl.BlockSpec((1, out_pad), lambda g: (0, 0)),
        ],
        out_specs=[
            pl.BlockSpec((rows_tile, out_pad), lambda g: (g, 0)),
            pl.BlockSpec((rows_tile, out_pad), lambda g: (g, 0)),
        ],
        scratch_shapes=[
            pltpu.VMEM((B, out_pad), jnp.float32),   # syn carry across grid steps
            pltpu.VMEM((B, out_pad), jnp.float32),   # mem carry across grid steps
        ],
    )

    spk_pad, mem_pad = pl.pallas_call(
        _synaptic_net_kernel,
        out_shape=(jax.ShapeDtypeStruct((T_pad * B, out_pad), jnp.float32),
                   jax.ShapeDtypeStruct((T_pad * B, out_pad), jnp.float32)),
        grid_spec=grid_spec,
        # Recurrent state carried across the time grid axis -> "arbitrary".
        compiler_params=pltpu.CompilerParams(dimension_semantics=("arbitrary",)),
    )(x_flat, w_pad, b_pad)

    spk = spk_pad[:T * B, :out_f].reshape(T, B, out_f)
    mem = mem_pad[:T * B, :out_f].reshape(T, B, out_f)
    return spk, mem


if __name__ == "__main__":
    key = jax.random.PRNGKey(0)
    kx, kw, kb = jax.random.split(key, 3)

    # Shapes implied by the module: Linear(1, 1), batch_size=1; T=20 timesteps
    # (not a multiple of 8, to exercise time padding).
    T, B, IN, OUT = 20, 1, 1, 1
    x_seq = 3.0 * jax.random.normal(kx, (T, B, IN), jnp.float32)

    # nn.Linear(1, 1) init: uniform(-1/sqrt(fan_in), 1/sqrt(fan_in)), fan_in = 1.
    w = jax.random.uniform(kw, (OUT, IN), jnp.float32, -1.0, 1.0)
    b = jax.random.uniform(kb, (OUT,), jnp.float32, -1.0, 1.0)

    # Small tile forces a 3-step grid -> exercises the cross-tile state carry.
    spk, mem = net_forward(x_seq, w, b, t_tile=8)
    jax.block_until_ready((spk, mem))

    # Pure-JAX reference: unfused, step-by-step Synaptic recurrence.
    syn_r = jnp.zeros((B, OUT), jnp.float32)
    mem_r = jnp.zeros((B, OUT), jnp.float32)
    spk_list, mem_list = [], []
    for t in range(T):
        cur = x_seq[t] @ w.T + b
        reset = (mem_r > THRESHOLD).astype(jnp.float32)
        syn_r = ALPHA * syn_r + cur
        mem_r = BETA * mem_r + syn_r - reset * THRESHOLD
        spk_r = (mem_r > THRESHOLD).astype(jnp.float32)
        spk_list.append(spk_r)
        mem_list.append(mem_r)
    spk_expected = jnp.stack(spk_list)
    mem_expected = jnp.stack(mem_list)

    assert jnp.allclose(spk, spk_expected, atol=1e-5), "spk mismatch (tiled)"
    assert jnp.allclose(mem, mem_expected, atol=1e-5), "mem mismatch (tiled)"

    # Also check the default (single-tile) path agrees.
    spk1, mem1 = net_forward(x_seq, w, b)
    jax.block_until_ready((spk1, mem1))
    assert jnp.allclose(spk1, spk_expected, atol=1e-5), "spk mismatch (default)"
    assert jnp.allclose(mem1, mem_expected, atol=1e-5), "mem mismatch (default)"

    print("KERNEL_OK")
</pallas_src>

<mosaic_0001>
module attributes {stable_mosaic.version = 11 : i64} {
  func.func @_synaptic_net_kernel(%arg0: i32, %arg1: memref<8x1xf32, #tpu.memory_space<vmem>>, %arg2: memref<1x128xf32, #tpu.memory_space<vmem>>, %arg3: memref<1x128xf32, #tpu.memory_space<vmem>>, %arg4: memref<8x128xf32, #tpu.memory_space<vmem>>, %arg5: memref<8x128xf32, #tpu.memory_space<vmem>>, %arg6: memref<1x128xf32, #tpu.memory_space<vmem>>, %arg7: memref<1x128xf32, #tpu.memory_space<vmem>>) attributes {dimension_semantics = [#tpu.dimension_semantics<arbitrary>], iteration_bounds = array<i64: 3>, scalar_prefetch = 0 : i64, scratch_operands = 2 : i64, tpu.core_type = #tpu.core_type<tc>, window_params = [{transform_indices = @transform_0, window_bounds = array<i64: 8, 1>}, {pipeline_mode = #tpu.pipeline_mode<synchronous>, transform_indices = @transform_1, window_bounds = array<i64: 1, 128>}, {pipeline_mode = #tpu.pipeline_mode<synchronous>, transform_indices = @transform_2, window_bounds = array<i64: 1, 128>}, {transform_indices = @transform_3, window_bounds = array<i64: 8, 128>}, {transform_indices = @transform_4, window_bounds = array<i64: 8, 128>}]} {
    %c0_i32 = arith.constant 0 : i32
    %0 = arith.cmpi eq, %arg0, %c0_i32 : i32
    %1 = arith.extui %0 : i1 to i32
    %c0_i32_0 = arith.constant 0 : i32
    %2 = arith.cmpi ne, %1, %c0_i32_0 : i32
    scf.if %2 {
      %cst_55 = arith.constant 0.000000e+00 : f32
      %169 = vector.broadcast %cst_55 : f32 to vector<1x128xf32>
      %c0_56 = arith.constant 0 : index
      %c0_57 = arith.constant 0 : index
      %170 = vector.load %arg6[%c0_56, %c0_57] : memref<1x128xf32, #tpu.memory_space<vmem>>, vector<1x128xf32>
      tpu.vector_store %arg6[%c0_56, %c0_57], %169 {strides = array<i32>} : memref<1x128xf32, #tpu.memory_space<vmem>>, vector<1x128xf32>,
      %cst_58 = arith.constant 0.000000e+00 : f32
      %171 = vector.broadcast %cst_58 : f32 to vector<1x128xf32>
      %c0_59 = arith.constant 0 : index
      %c0_60 = arith.constant 0 : index
      %172 = vector.load %arg7[%c0_59, %c0_60] : memref<1x128xf32, #tpu.memory_space<vmem>>, vector<1x128xf32>
      tpu.vector_store %arg7[%c0_59, %c0_60], %171 {strides = array<i32>} : memref<1x128xf32, #tpu.memory_space<vmem>>, vector<1x128xf32>,
    } else {
    }
    %c0 = arith.constant 0 : index
    %c0_1 = arith.constant 0 : index
    %3 = vector.load %arg2[%c0, %c0_1] : memref<1x128xf32, #tpu.memory_space<vmem>>, vector<1x128xf32>
    %c0_2 = arith.constant 0 : index
    %c0_3 = arith.constant 0 : index
    %4 = vector.load %arg3[%c0_2, %c0_3] : memref<1x128xf32, #tpu.memory_space<vmem>>, vector<1x128xf32>
    %5 = vector.shape_cast %4 : vector<1x128xf32> to vector<1x128xf32>
    %6 = vector.broadcast %5 : vector<1x128xf32> to vector<8x128xf32>
    %c0_4 = arith.constant 0 : index
    %c0_5 = arith.constant 0 : index
    %7 = vector.load %arg6[%c0_4, %c0_5] : memref<1x128xf32, #tpu.memory_space<vmem>>, vector<1x128xf32>
    %c0_6 = arith.constant 0 : index
    %c0_7 = arith.constant 0 : index
    %8 = vector.load %arg7[%c0_6, %c0_7] : memref<1x128xf32, #tpu.memory_space<vmem>>, vector<1x128xf32>
    %c0_i32_8 = arith.constant 0 : i32
    %c8_i32 = arith.constant 8 : i32
    %9 = arith.muli %c0_i32_8, %c8_i32 : i32
    %10 = tpu.assume_multiple %9, 8 : i32
    %11 = arith.index_cast %10 : i32 to index
    %c0_9 = arith.constant 0 : index
    %12 = vector.load %arg1[%11, %c0_9] : memref<8x1xf32, #tpu.memory_space<vmem>>, vector<8x1xf32>
    %13 = vector.broadcast %12 : vector<8x1xf32> to vector<8x128xf32>
    %14 = vector.broadcast %3 : vector<1x128xf32> to vector<8x128xf32>
    %15 = arith.mulf %13, %14 : vector<8x128xf32>
    %16 = arith.addf %6, %15 : vector<8x128xf32>
    %17 = vector.extract_strided_slice %16 {offsets = [0, 0], sizes = [1, 128], strides = [1, 1]} : vector<8x128xf32> to vector<1x128xf32>
    %cst = arith.constant 1.000000e+00 : f32
    %18 = vector.broadcast %cst : f32 to vector<1x128xf32>
    %19 = arith.cmpf ogt, %8, %18 : vector<1x128xf32>
    %20 = arith.extui %19 : vector<1x128xi1> to vector<1x128xi32>
    %21 = arith.sitofp %20 : vector<1x128xi32> to vector<1x128xf32>
    %cst_10 = arith.constant 5.000000e-01 : f32
    %22 = vector.broadcast %cst_10 : f32 to vector<1x128xf32>
    %23 = arith.mulf %22, %7 : vector<1x128xf32>
    %24 = arith.addf %23, %17 : vector<1x128xf32>
    %cst_11 = arith.constant 5.000000e-01 : f32
    %25 = vector.broadcast %cst_11 : f32 to vector<1x128xf32>
    %26 = arith.mulf %25, %8 : vector<1x128xf32>
    %27 = arith.addf %26, %24 : vector<1x128xf32>
    %cst_12 = arith.constant 1.000000e+00 : f32
    %28 = vector.broadcast %cst_12 : f32 to vector<1x128xf32>
    %29 = arith.mulf %21, %28 : vector<1x128xf32>
    %30 = arith.subf %27, %29 : vector<1x128xf32>
    %cst_13 = arith.constant 1.000000e+00 : f32
    %31 = vector.broadcast %cst_13 : f32 to vector<1x128xf32>
    %32 = arith.cmpf ogt, %30, %31 : vector<1x128xf32>
    %33 = arith.extui %32 : vector<1x128xi1> to vector<1x128xi32>
    %34 = arith.sitofp %33 : vector<1x128xi32> to vector<1x128xf32>
    %35 = vector.extract_strided_slice %16 {offsets = [1, 0], sizes = [1, 128], strides = [1, 1]} : vector<8x128xf32> to vector<1x128xf32>
    %cst_14 = arith.constant 1.000000e+00 : f32
    %36 = vector.broadcast %cst_14 : f32 to vector<1x128xf32>
    %37 = arith.cmpf ogt, %30, %36 : vector<1x128xf32>
    %38 = arith.extui %37 : vector<1x128xi1> to vector<1x128xi32>
    %39 = arith.sitofp %38 : vector<1x128xi32> to vector<1x128xf32>
    %cst_15 = arith.constant 5.000000e-01 : f32
    %40 = vector.broadcast %cst_15 : f32 to vector<1x128xf32>
    %41 = arith.mulf %40, %24 : vector<1x128xf32>
    %42 = arith.addf %41, %35 : vector<1x128xf32>
    %cst_16 = arith.constant 5.000000e-01 : f32
    %43 = vector.broadcast %cst_16 : f32 to vector<1x128xf32>
    %44 = arith.mulf %43, %30 : vector<1x128xf32>
    %45 = arith.addf %44, %42 : vector<1x128xf32>
    %cst_17 = arith.constant 1.000000e+00 : f32
    %46 = vector.broadcast %cst_17 : f32 to vector<1x128xf32>
    %47 = arith.mulf %39, %46 : vector<1x128xf32>
    %48 = arith.subf %45, %47 : vector<1x128xf32>
    %cst_18 = arith.constant 1.000000e+00 : f32
    %49 = vector.broadcast %cst_18 : f32 to vector<1x128xf32>
    %50 = arith.cmpf ogt, %48, %49 : vector<1x128xf32>
    %51 = arith.extui %50 : vector<1x128xi1> to vector<1x128xi32>
    %52 = arith.sitofp %51 : vector<1x128xi32> to vector<1x128xf32>
    %53 = vector.extract_strided_slice %16 {offsets = [2, 0], sizes = [1, 128], strides = [1, 1]} : vector<8x128xf32> to vector<1x128xf32>
    %cst_19 = arith.constant 1.000000e+00 : f32
    %54 = vector.broadcast %cst_19 : f32 to vector<1x128xf32>
    %55 = arith.cmpf ogt, %48, %54 : vector<1x128xf32>
    %56 = arith.extui %55 : vector<1x128xi1> to vector<1x128xi32>
    %57 = arith.sitofp %56 : vector<1x128xi32> to vector<1x128xf32>
    %cst_20 = arith.constant 5.000000e-01 : f32
    %58 = vector.broadcast %cst_20 : f32 to vector<1x128xf32>
    %59 = arith.mulf %58, %42 : vector<1x128xf32>
    %60 = arith.addf %59, %53 : vector<1x128xf32>
    %cst_21 = arith.constant 5.000000e-01 : f32
    %61 = vector.broadcast %cst_21 : f32 to vector<1x128xf32>
    %62 = arith.mulf %61, %48 : vector<1x128xf32>
    %63 = arith.addf %62, %60 : vector<1x128xf32>
    %cst_22 = arith.constant 1.000000e+00 : f32
    %64 = vector.broadcast %cst_22 : f32 to vector<1x128xf32>
    %65 = arith.mulf %57, %64 : vector<1x128xf32>
    %66 = arith.subf %63, %65 : vector<1x128xf32>
    %cst_23 = arith.constant 1.000000e+00 : f32
    %67 = vector.broadcast %cst_23 : f32 to vector<1x128xf32>
    %68 = arith.cmpf ogt, %66, %67 : vector<1x128xf32>
    %69 = arith.extui %68 : vector<1x128xi1> to vector<1x128xi32>
    %70 = arith.sitofp %69 : vector<1x128xi32> to vector<1x128xf32>
    %71 = vector.extract_strided_slice %16 {offsets = [3, 0], sizes = [1, 128], strides = [1, 1]} : vector<8x128xf32> to vector<1x128xf32>
    %cst_24 = arith.constant 1.000000e+00 : f32
    %72 = vector.broadcast %cst_24 : f32 to vector<1x128xf32>
    %73 = arith.cmpf ogt, %66, %72 : vector<1x128xf32>
    %74 = arith.extui %73 : vector<1x128xi1> to vector<1x128xi32>
    %75 = arith.sitofp %74 : vector<1x128xi32> to vector<1x128xf32>
    %cst_25 = arith.constant 5.000000e-01 : f32
    %76 = vector.broadcast %cst_25 : f32 to vector<1x128xf32>
    %77 = arith.mulf %76, %60 : vector<1x128xf32>
    %78 = arith.addf %77, %71 : vector<1x128xf32>
    %cst_26 = arith.constant 5.000000e-01 : f32
    %79 = vector.broadcast %cst_26 : f32 to vector<1x128xf32>
    %80 = arith.mulf %79, %66 : vector<1x128xf32>
    %81 = arith.addf %80, %78 : vector<1x128xf32>
    %cst_27 = arith.constant 1.000000e+00 : f32
    %82 = vector.broadcast %cst_27 : f32 to vector<1x128xf32>
    %83 = arith.mulf %75, %82 : vector<1x128xf32>
    %84 = arith.subf %81, %83 : vector<1x128xf32>
    %cst_28 = arith.constant 1.000000e+00 : f32
    %85 = vector.broadcast %cst_28 : f32 to vector<1x128xf32>
    %86 = arith.cmpf ogt, %84, %85 : vector<1x128xf32>
    %87 = arith.extui %86 : vector<1x128xi1> to vector<1x128xi32>
    %88 = arith.sitofp %87 : vector<1x128xi32> to vector<1x128xf32>
    %89 = vector.extract_strided_slice %16 {offsets = [4, 0], sizes = [1, 128], strides = [1, 1]} : vector<8x128xf32> to vector<1x128xf32>
    %cst_29 = arith.constant 1.000000e+00 : f32
    %90 = vector.broadcast %cst_29 : f32 to vector<1x128xf32>
    %91 = arith.cmpf ogt, %84, %90 : vector<1x128xf32>
    %92 = arith.extui %91 : vector<1x128xi1> to vector<1x128xi32>
    %93 = arith.sitofp %92 : vector<1x128xi32> to vector<1x128xf32>
    %cst_30 = arith.constant 5.000000e-01 : f32
    %94 = vector.broadcast %cst_30 : f32 to vector<1x128xf32>
    %95 = arith.mulf %94, %78 : vector<1x128xf32>
    %96 = arith.addf %95, %89 : vector<1x128xf32>
    %cst_31 = arith.constant 5.000000e-01 : f32
    %97 = vector.broadcast %cst_31 : f32 to vector<1x128xf32>
    %98 = arith.mulf %97, %84 : vector<1x128xf32>
    %99 = arith.addf %98, %96 : vector<1x128xf32>
    %cst_32 = arith.constant 1.000000e+00 : f32
    %100 = vector.broadcast %cst_32 : f32 to vector<1x128xf32>
    %101 = arith.mulf %93, %100 : vector<1x128xf32>
    %102 = arith.subf %99, %101 : vector<1x128xf32>
    %cst_33 = arith.constant 1.000000e+00 : f32
    %103 = vector.broadcast %cst_33 : f32 to vector<1x128xf32>
    %104 = arith.cmpf ogt, %102, %103 : vector<1x128xf32>
    %105 = arith.extui %104 : vector<1x128xi1> to vector<1x128xi32>
    %106 = arith.sitofp %105 : vector<1x128xi32> to vector<1x128xf32>
    %107 = vector.extract_strided_slice %16 {offsets = [5, 0], sizes = [1, 128], strides = [1, 1]} : vector<8x128xf32> to vector<1x128xf32>
    %cst_34 = arith.constant 1.000000e+00 : f32
    %108 = vector.broadcast %cst_34 : f32 to vector<1x128xf32>
    %109 = arith.cmpf ogt, %102, %108 : vector<1x128xf32>
    %110 = arith.extui %109 : vector<1x128xi1> to vector<1x128xi32>
    %111 = arith.sitofp %110 : vector<1x128xi32> to vector<1x128xf32>
    %cst_35 = arith.constant 5.000000e-01 : f32
    %112 = vector.broadcast %cst_35 : f32 to vector<1x128xf32>
    %113 = arith.mulf %112, %96 : vector<1x128xf32>
    %114 = arith.addf %113, %107 : vector<1x128xf32>
    %cst_36 = arith.constant 5.000000e-01 : f32
    %115 = vector.broadcast %cst_36 : f32 to vector<1x128xf32>
    %116 = arith.mulf %115, %102 : vector<1x128xf32>
    %117 = arith.addf %116, %114 : vector<1x128xf32>
    %cst_37 = arith.constant 1.000000e+00 : f32
    %118 = vector.broadcast %cst_37 : f32 to vector<1x128xf32>
    %119 = arith.mulf %111, %118 : vector<1x128xf32>
    %120 = arith.subf %117, %119 : vector<1x128xf32>
    %cst_38 = arith.constant 1.000000e+00 : f32
    %121 = vector.broadcast %cst_38 : f32 to vector<1x128xf32>
    %122 = arith.cmpf ogt, %120, %121 : vector<1x128xf32>
    %123 = arith.extui %122 : vector<1x128xi1> to vector<1x128xi32>
    %124 = arith.sitofp %123 : vector<1x128xi32> to vector<1x128xf32>
    %125 = vector.extract_strided_slice %16 {offsets = [6, 0], sizes = [1, 128], strides = [1, 1]} : vector<8x128xf32> to vector<1x128xf32>
    %cst_39 = arith.constant 1.000000e+00 : f32
    %126 = vector.broadcast %cst_39 : f32 to vector<1x128xf32>
    %127 = arith.cmpf ogt, %120, %126 : vector<1x128xf32>
    %128 = arith.extui %127 : vector<1x128xi1> to vector<1x128xi32>
    %129 = arith.sitofp %128 : vector<1x128xi32> to vector<1x128xf32>
    %cst_40 = arith.constant 5.000000e-01 : f32
    %130 = vector.broadcast %cst_40 : f32 to vector<1x128xf32>
    %131 = arith.mulf %130, %114 : vector<1x128xf32>
    %132 = arith.addf %131, %125 : vector<1x128xf32>
    %cst_41 = arith.constant 5.000000e-01 : f32
    %133 = vector.broadcast %cst_41 : f32 to vector<1x128xf32>
    %134 = arith.mulf %133, %120 : vector<1x128xf32>
    %135 = arith.addf %134, %132 : vector<1x128xf32>
    %cst_42 = arith.constant 1.000000e+00 : f32
    %136 = vector.broadcast %cst_42 : f32 to vector<1x128xf32>
    %137 = arith.mulf %129, %136 : vector<1x128xf32>
    %138 = arith.subf %135, %137 : vector<1x128xf32>
    %cst_43 = arith.constant 1.000000e+00 : f32
    %139 = vector.broadcast %cst_43 : f32 to vector<1x128xf32>
    %140 = arith.cmpf ogt, %138, %139 : vector<1x128xf32>
    %141 = arith.extui %140 : vector<1x128xi1> to vector<1x128xi32>
    %142 = arith.sitofp %141 : vector<1x128xi32> to vector<1x128xf32>
    %143 = vector.extract_strided_slice %16 {offsets = [7, 0], sizes = [1, 128], strides = [1, 1]} : vector<8x128xf32> to vector<1x128xf32>
    %cst_44 = arith.constant 1.000000e+00 : f32
    %144 = vector.broadcast %cst_44 : f32 to vector<1x128xf32>
    %145 = arith.cmpf ogt, %138, %144 : vector<1x128xf32>
    %146 = arith.extui %145 : vector<1x128xi1> to vector<1x128xi32>
    %147 = arith.sitofp %146 : vector<1x128xi32> to vector<1x128xf32>
    %cst_45 = arith.constant 5.000000e-01 : f32
    %148 = vector.broadcast %cst_45 : f32 to vector<1x128xf32>
    %149 = arith.mulf %148, %132 : vector<1x128xf32>
    %150 = arith.addf %149, %143 : vector<1x128xf32>
    %cst_46 = arith.constant 5.000000e-01 : f32
    %151 = vector.broadcast %cst_46 : f32 to vector<1x128xf32>
    %152 = arith.mulf %151, %138 : vector<1x128xf32>
    %153 = arith.addf %152, %150 : vector<1x128xf32>
    %cst_47 = arith.constant 1.000000e+00 : f32
    %154 = vector.broadcast %cst_47 : f32 to vector<1x128xf32>
    %155 = arith.mulf %147, %154 : vector<1x128xf32>
    %156 = arith.subf %153, %155 : vector<1x128xf32>
    %cst_48 = arith.constant 1.000000e+00 : f32
    %157 = vector.broadcast %cst_48 : f32 to vector<1x128xf32>
    %158 = arith.cmpf ogt, %156, %157 : vector<1x128xf32>
    %159 = arith.extui %158 : vector<1x128xi1> to vector<1x128xi32>
    %160 = arith.sitofp %159 : vector<1x128xi32> to vector<1x128xf32>
    %161 = tpu.concatenate %34, %52, %70, %88, %106, %124, %142, %160 in 0 : vector<1x128xf32>, vector<1x128xf32>, vector<1x128xf32>, vector<1x128xf32>, vector<1x128xf32>, vector<1x128xf32>, vector<1x128xf32>, vector<1x128xf32> -> vector<8x128xf32>
    %162 = arith.index_cast %10 : i32 to index
    %c0_49 = arith.constant 0 : index
    %163 = vector.load %arg4[%162, %c0_49] : memref<8x128xf32, #tpu.memory_space<vmem>>, vector<8x128xf32>
    tpu.vector_store %arg4[%162, %c0_49], %161 {strides = array<i32>} : memref<8x128xf32, #tpu.memory_space<vmem>>, vector<8x128xf32>,
    %164 = tpu.concatenate %30, %48, %66, %84, %102, %120, %138, %156 in 0 : vector<1x128xf32>, vector<1x128xf32>, vector<1x128xf32>, vector<1x128xf32>, vector<1x128xf32>, vector<1x128xf32>, vector<1x128xf32>, vector<1x128xf32> -> vector<8x128xf32>
    %165 = arith.index_cast %10 : i32 to index
    %c0_50 = arith.constant 0 : index
    %166 = vector.load %arg5[%165, %c0_50] : memref<8x128xf32, #tpu.memory_space<vmem>>, vector<8x128xf32>
    tpu.vector_store %arg5[%165, %c0_50], %164 {strides = array<i32>} : memref<8x128xf32, #tpu.memory_space<vmem>>, vector<8x128xf32>,
    %c1_i32 = arith.constant 1 : i32
    %c0_51 = arith.constant 0 : index
    %c0_52 = arith.constant 0 : index
    %167 = vector.load %arg6[%c0_51, %c0_52] : memref<1x128xf32, #tpu.memory_space<vmem>>, vector<1x128xf32>
    tpu.vector_store %arg6[%c0_51, %c0_52], %150 {strides = array<i32>} : memref<1x128xf32, #tpu.memory_space<vmem>>, vector<1x128xf32>,
    %c0_53 = arith.constant 0 : index
    %c0_54 = arith.constant 0 : index
    %168 = vector.load %arg7[%c0_53, %c0_54] : memref<1x128xf32, #tpu.memory_space<vmem>>, vector<1x128xf32>
    tpu.vector_store %arg7[%c0_53, %c0_54], %156 {strides = array<i32>} : memref<1x128xf32, #tpu.memory_space<vmem>>, vector<1x128xf32>,
    return
  }
  func.func @transform_0(%arg0: i32) -> (i32, i32) {
    %c0_i32 = arith.constant 0 : i32
    %c0_i32_0 = arith.constant 0 : i32
    return %arg0, %c0_i32 : i32, i32
  }
  func.func @transform_1(%arg0: i32) -> (i32, i32) {
    %c0_i32 = arith.constant 0 : i32
    %c0_i32_0 = arith.constant 0 : i32
    %c0_i32_1 = arith.constant 0 : i32
    return %c0_i32, %c0_i32_0 : i32, i32
  }
  func.func @transform_2(%arg0: i32) -> (i32, i32) {
    %c0_i32 = arith.constant 0 : i32
    %c0_i32_0 = arith.constant 0 : i32
    %c0_i32_1 = arith.constant 0 : i32
    return %c0_i32, %c0_i32_0 : i32, i32
  }
  func.func @transform_3(%arg0: i32) -> (i32, i32) {
    %c0_i32 = arith.constant 0 : i32
    %c0_i32_0 = arith.constant 0 : i32
    return %arg0, %c0_i32 : i32, i32
  }
  func.func @transform_4(%arg0: i32) -> (i32, i32) {
    %c0_i32 = arith.constant 0 : i32
    %c0_i32_0 = arith.constant 0 : i32
    return %arg0, %c0_i32 : i32, i32
  }
}

</mosaic_0001>

<llo_original>
// kernel: net_forward.1
$region0: #{net_forward.1}
  #allocation0 [shape = 'u32[]', space=smem, size = 0x4, offset = 0x4, fixed_abs, tag = 'smem constant byte address 0x4 - core index']
  #allocation1 [shape = 'u32[72,128]{1,0:T(1,128)}', space=vmem, size = 0x9000, scoped, tag = 'internal scratch']
  #allocation2 [shape = 'f32[1,128]{1,0:T(1,128)}', space=vmem, size = 0x200, scoped, tag = 'scratch operand']
  #allocation3 [shape = 'f32[1,128]{1,0:T(1,128)}', space=vmem, size = 0x200, scoped, tag = 'scratch operand']
  %s0 = inlined_call_operand.vmem [shape: f32[24,1], index: 0, kind: input, shape index: {}]
  %s1 = inlined_call_operand.vmem [shape: f32[1,128], index: 1, kind: input, shape index: {}]
  %s2 = inlined_call_operand.vmem [shape: f32[1,128], index: 2, kind: input, shape index: {}]
  %s3 = inlined_call_operand.vmem [shape: f32[24,128], index: 3, kind: output, shape index: {0}]
  %s4 = inlined_call_operand.vmem [shape: f32[24,128], index: 4, kind: output, shape index: {1}]
  %5 = xla_tuple %s3, %s4
  %s6 = sld [smem:[#allocation0]]
  $region57: #{net_forward.1} parent=0
    _
  %s8 = ssub.s32 1, %s6
  %s9 = scalar_select 0, %s8, %s6
  loop: start=0, step=1, limit=5
  $region2: #{net_forward.1} parent=0 // loop_pre_header
    _
  $region3: #{net_forward.1} parent=0 // loop_header
    %s11 = sphi 0, %s15
    %p12 = scmp.ge.s32.totalorder %s11, 5
    %s21 = sphi 0, %s23
    %s24 = sphi 0, %s21
    %s25 = sphi 0, %s24
    %s41 = sphi 0, %s25
    %s45 = sphi 0, %s45
    %s47 = sphi 0, %s45
    %s48 = sphi 0, %s47
    %s62 = sphi 0, %s48
    %s66 = sphi 0, %s66
    %s68 = sphi 0, %s66
    %s69 = sphi 0, %s68
    %s83 = sphi 0, %s69
    %s89 = sphi 0, %s91
    %s92 = sphi 0, %s89
    %s93 = sphi 0, %s92
    %s109 = sphi 0, %s93
    %s115 = sphi 0, %s117
    %s118 = sphi 0, %s115
    %s119 = sphi 0, %s118
    %s135 = sphi 0, %s119
  $region4: #{net_forward.1} parent=0 // loop_header_branch
    %14 = sbr.rel (%p12) target = $region8
  $region5: #{net_forward.1} parent=0 // loop_body
    %s16 = ssub.s32 %s11, 1
    %s17 = ssub.s32 %s11, 2
    %s18 = sadd.s32 %s11, 1
    %s19 = ssub.s32 %s11, %s18
    %p20 = scmp.eq.s32.totalorder %s19, 0
    %s22 = sadd.s32 %s21, 1
    %s23 = scalar_select %p20, %s21, %s22
    %p26 = pneg %p20
    %p27 = scmp.eq.s32.totalorder %s11, 2
    %p28 = por %p26, %p27
    %p29 = scmp.ne.s32.totalorder %s21, %s24
    %p30 = scmp.eq.s32.totalorder %s11, 0
    %p31 = por %p29, %p30
    %p32 = scmp.ne.s32.totalorder %s21, %s24
    %p33 = scmp.eq.s32.totalorder %s16, 2
    %p34 = por %p32, %p33
    %p35 = scmp.ne.s32.totalorder %s24, %s25
    %p36 = scmp.eq.s32.totalorder %s16, 0
    %p37 = por %p35, %p36
    %p38 = scmp.ne.s32.totalorder %s24, %s25
    %p39 = scmp.eq.s32.totalorder %s17, 2
    %p40 = por %p38, %p39
    %p42 = scmp.ne.s32.totalorder %s25, %s41
    %p43 = scmp.eq.s32.totalorder %s17, 0
    %p44 = por %p42, %p43
    %s46 = sadd.s32 %s45, 1
    %p49 = scmp.eq.s32.totalorder %s11, 2
    %p50 = scmp.ne.s32.totalorder %s45, %s47
    %p51 = scmp.eq.s32.totalorder %s11, 0
    %p52 = por %p50, %p51
    %p53 = scmp.ne.s32.totalorder %s45, %s47
    %p54 = scmp.eq.s32.totalorder %s16, 2
    %p55 = por %p53, %p54
    %p56 = scmp.ne.s32.totalorder %s47, %s48
    %p57 = scmp.eq.s32.totalorder %s16, 0
    %p58 = por %p56, %p57
    %p59 = scmp.ne.s32.totalorder %s47, %s48
    %p60 = scmp.eq.s32.totalorder %s17, 2
    %p61 = por %p59, %p60
    %p63 = scmp.ne.s32.totalorder %s48, %s62
    %p64 = scmp.eq.s32.totalorder %s17, 0
    %p65 = por %p63, %p64
    %s67 = sadd.s32 %s66, 1
    %p70 = scmp.eq.s32.totalorder %s11, 2
    %p71 = scmp.ne.s32.totalorder %s66, %s68
    %p72 = scmp.eq.s32.totalorder %s11, 0
    %p73 = por %p71, %p72
    %p74 = scmp.ne.s32.totalorder %s66, %s68
    %p75 = scmp.eq.s32.totalorder %s16, 2
    %p76 = por %p74, %p75
    %p77 = scmp.ne.s32.totalorder %s68, %s69
    %p78 = scmp.eq.s32.totalorder %s16, 0
    %p79 = por %p77, %p78
    %p80 = scmp.ne.s32.totalorder %s68, %s69
    %p81 = scmp.eq.s32.totalorder %s17, 2
    %p82 = por %p80, %p81
    %p84 = scmp.ne.s32.totalorder %s69, %s83
    %p85 = scmp.eq.s32.totalorder %s17, 0
    %p86 = por %p84, %p85
    %s87 = ssub.s32 %s11, %s18
    %p88 = scmp.eq.s32.totalorder %s87, 0
    %s90 = sadd.s32 %s89, 1
    %s91 = scalar_select %p88, %s89, %s90
    %p94 = pneg %p88
    %p95 = scmp.eq.s32.totalorder %s11, 2
    %p96 = por %p94, %p95
    %p97 = scmp.ne.s32.totalorder %s89, %s92
    %p98 = scmp.eq.s32.totalorder %s11, 0
    %p99 = por %p97, %p98
    %p100 = scmp.ne.s32.totalorder %s89, %s92
    %p101 = scmp.eq.s32.totalorder %s16, 2
    %p102 = por %p100, %p101
    %p103 = scmp.ne.s32.totalorder %s92, %s93
    %p104 = scmp.eq.s32.totalorder %s16, 0
    %p105 = por %p103, %p104
    %p106 = scmp.ne.s32.totalorder %s92, %s93
    %p107 = scmp.eq.s32.totalorder %s17, 2
    %p108 = por %p106, %p107
    %p110 = scmp.ne.s32.totalorder %s93, %s109
    %p111 = scmp.eq.s32.totalorder %s17, 0
    %p112 = por %p110, %p111
    %s113 = ssub.s32 %s11, %s18
    %p114 = scmp.eq.s32.totalorder %s113, 0
    %s116 = sadd.s32 %s115, 1
    %s117 = scalar_select %p114, %s115, %s116
    %p120 = pneg %p114
    %p121 = scmp.eq.s32.totalorder %s11, 2
    %p122 = por %p120, %p121
    %p123 = scmp.ne.s32.totalorder %s115, %s118
    %p124 = scmp.eq.s32.totalorder %s11, 0
    %p125 = por %p123, %p124
    %p126 = scmp.ne.s32.totalorder %s115, %s118
    %p127 = scmp.eq.s32.totalorder %s16, 2
    %p128 = por %p126, %p127
    %p129 = scmp.ne.s32.totalorder %s118, %s119
    %p130 = scmp.eq.s32.totalorder %s16, 0
    %p131 = por %p129, %p130
    %p132 = scmp.ne.s32.totalorder %s118, %s119
    %p133 = scmp.eq.s32.totalorder %s17, 2
    %p134 = por %p132, %p133
    %p136 = scmp.ne.s32.totalorder %s119, %s135
    %p137 = scmp.eq.s32.totalorder %s17, 0
    %p138 = por %p136, %p137
    %p139 = scmp.le.s32.totalorder 1, %s11
    %p140 = scmp.lt.s32.totalorder %s11, 4
    %p141 = pnand %p139, %p140
    %p142 = pneg %p141
    // Predicated region
    $region9: #{net_forward.1} parent=5 // pred_check
      _
    $region10: #{net_forward.1} parent=5 // pred_check_branch
      %144 = sbr.rel (%p141) target = $region12
    $region11: #{net_forward.1} parent=5 // pred_region
      %s145 = ssub.s32 %s11, 1
      // Predicated region
      $region13: #{net_forward.1} parent=11 // pred_check
        %p146 = pneg %p58
      $region14: #{net_forward.1} parent=11 // pred_check_branch
        %148 = sbr.rel (%p146) target = $region16
      $region15: #{net_forward.1} parent=11 // pred_region
        _
      $region16: #{net_forward.1} parent=11 // pred_fallthru
        _
      // Predicated region
      $region17: #{net_forward.1} parent=11 // pred_check
        %p149 = pneg %p79
      $region18: #{net_forward.1} parent=11 // pred_check_branch
        %151 = sbr.rel (%p149) target = $region20
      $region19: #{net_forward.1} parent=11 // pred_region
        _
      $region20: #{net_forward.1} parent=11 // pred_fallthru
        _
    $region12: #{net_forward.1} parent=5 // pred_fallthru
      _
    %p152 = scmp.lt.s32.totalorder %s11, 3
    // Predicated region
    $region21: #{net_forward.1} parent=5 // pred_check
      %p153 = pneg %p152
    $region22: #{net_forward.1} parent=5 // pred_check_branch
      %155 = sbr.rel (%p153) target = $region24
    $region23: #{net_forward.1} parent=5 // pred_region
      // Predicated region
      $region25: #{net_forward.1} parent=23 // pred_check
        %p156 = pneg %p31
      $region26: #{net_forward.1} parent=23 // pred_check_branch
        %158 = sbr.rel (%p156) target = $region28
      $region27: #{net_forward.1} parent=23 // pred_region
        %p159 = scmp.lt.s32.totalorder %s11, 2
        %s160 = scalar_select %p159, %s11, 2
        %s161 = smul.addr %s160, 8
        %s162 = scalar_lea.vmem %s0, %s161
      $region28: #{net_forward.1} parent=23 // pred_fallthru
        _
    $region24: #{net_forward.1} parent=5 // pred_fallthru
      _
    %p163 = scmp.le.s32.totalorder 1, %s11
    %p164 = scmp.lt.s32.totalorder %s11, 4
    %p165 = pnand %p163, %p164
    %p166 = pneg %p165
    // Predicated region
    $region29: #{net_forward.1} parent=5 // pred_check
      _
    $region30: #{net_forward.1} parent=5 // pred_check_branch
      %168 = sbr.rel (%p165) target = $region32
    $region31: #{net_forward.1} parent=5 // pred_region
      %s169 = ssub.s32 %s11, 1
      %p170 = scmp.lt.s32.totalorder %s16, 2
      %s171 = scalar_select %p170, %s16, 2
      %s172 = smul.addr %s171, 8
      %s173 = scalar_lea.vmem %s0, %s172
      %p174 = pneg %p37
      %p175 = pneg %p34
      %p176 = pneg %p58
      %p177 = pneg %p55
      %p178 = pneg %p79
      %p179 = pneg %p76
      %p180 = pneg %p105
      %p181 = pneg %p102
      %p182 = scmp.lt.s32.totalorder %s16, 2
      %s183 = scalar_select %p182, %s16, 2
      %s184 = smul.addr %s183, 8
      %s185 = scalar_lea.vmem %s3, %s184
      %p186 = pneg %p131
      %p187 = pneg %p128
      %p188 = scmp.lt.s32.totalorder %s16, 2
      %s189 = scalar_select %p188, %s16, 2
      %s190 = smul.addr %s189, 8
      %s191 = scalar_lea.vmem %s4, %s190
      %p192 = scmp.lt.s32.totalorder %s16, 2
      %s193 = scalar_select %p192, %s16, 2
      %s194 = smul.addr %s193, 8
      %s195 = scalar_lea.vmem %s0, %s194
      %p196 = scmp.lt.s32.totalorder %s16, 2
      %s197 = scalar_select %p196, %s16, 2
      %s198 = smul.addr %s197, 8
      %s199 = scalar_lea.vmem %s3, %s198
      %p200 = scmp.lt.s32.totalorder %s16, 2
      %s201 = scalar_select %p200, %s16, 2
      %s202 = smul.addr %s201, 8
      %s203 = scalar_lea.vmem %s4, %s202
      %p204 = scmp.eq.s32.totalorder %s16, 0
      // Predicated region
      $region33: #{net_forward.1} parent=31 // pred_check
        %p205 = pneg %p204
      $region34: #{net_forward.1} parent=31 // pred_check_branch
        %207 = sbr.rel (%p205) target = $region36
      $region35: #{net_forward.1} parent=31 // pred_region
        %208 = vst [vmem:[#allocation2] sm:$0x1] 0.0
        %209 = vst [vmem:[#allocation3] sm:$0x1] 0.0
      $region36: #{net_forward.1} parent=31 // pred_fallthru
        _
      %v210 = vld [vmem:[%s1] sm:$0x1]
      %v211 = vld [vmem:[%s2] sm:$0x1]
      %v213 = vperm.slane %v211, 0
      %v215 = vld [vmem:[#allocation2] sm:$0x1]
      %v216 = vld [vmem:[#allocation3] sm:$0x1]
      %v217 = vld [vmem:[%s195] sm:$0xff]
      %219 = vset.pattern.permute.xlu0 0
      %220 = vperm.xlu0 %219, %v217
      %v221 = vpop.permute.xlu0 %220
      %v224 = vperm.slane %v210, 0
      %v226 = vmul.f32 %v221, %v224
      %v227 = vadd.f32 %v213, %v226
      %vm228 = vcmp.gt.f32.partialorder %v216, 1.0
      %v229 = vsel %vm228, 1, 0
      %v230 = vcvt.s32.f32 %v229
      %v231 = vmul.f32 %v215, 0.5
      %v232 = vadd.f32 %v231, %v227
      %v233 = vmul.f32 %v216, 0.5
      %v234 = vadd.f32 %v233, %v232
      %v235 = vsub.f32 %v234, %v230
      %vm236 = vcmp.gt.f32.partialorder %v235, 1.0
      %v237 = vsel %vm236, 1, 0
      %v238 = vcvt.s32.f32 %v237
      %v239 = vmul.f32 %v232, 0.5
      %241 = vst [vmem:[#allocation1] sm:$0xff] %v227
      %s242 = scalar_lea.vmem [#allocation1], 1
      %v243 = vld [vmem:[%s242] ss:$9 sm:$0xff]
      %v245 = vadd.f32 %v239, %v243
      %v246 = vmul.f32 %v235, 0.5
      %v247 = vadd.f32 %v246, %v245
      %v248 = vsub.f32 %v247, %v238
      %vm249 = vcmp.gt.f32.partialorder %v248, 1.0
      %v250 = vsel %vm249, 1, 0
      %v251 = vcvt.s32.f32 %v250
      %v252 = vmul.f32 %v245, 0.5
      %253 = vst [vmem:[#allocation1] sm:$0xff] %v227
      %s254 = scalar_lea.vmem [#allocation1], 2
      %v255 = vld [vmem:[%s254] ss:$9 sm:$0xff]
      %v257 = vadd.f32 %v252, %v255
      %v258 = vmul.f32 %v248, 0.5
      %v259 = vadd.f32 %v258, %v257
      %v260 = vsub.f32 %v259, %v251
      %vm261 = vcmp.gt.f32.partialorder %v260, 1.0
      %v262 = vsel %vm261, 1, 0
      %v263 = vcvt.s32.f32 %v262
      %v264 = vmul.f32 %v257, 0.5
      %265 = vst [vmem:[#allocation1] sm:$0xff] %v227
      %s266 = scalar_lea.vmem [#allocation1], 3
      %v267 = vld [vmem:[%s266] ss:$9 sm:$0xff]
      %v269 = vadd.f32 %v264, %v267
      %v270 = vmul.f32 %v260, 0.5
      %v271 = vadd.f32 %v270, %v269
      %v272 = vsub.f32 %v271, %v263
      %vm273 = vcmp.gt.f32.partialorder %v272, 1.0
      %v274 = vsel %vm273, 1, 0
      %v275 = vcvt.s32.f32 %v274
      %v276 = vmul.f32 %v269, 0.5
      %277 = vst [vmem:[#allocation1] sm:$0xff] %v227
      %s278 = scalar_lea.vmem [#allocation1], 4
      %v279 = vld [vmem:[%s278] ss:$9 sm:$0xff]
      %v281 = vadd.f32 %v276, %v279
      %v282 = vmul.f32 %v272, 0.5
      %v283 = vadd.f32 %v282, %v281
      %v284 = vsub.f32 %v283, %v275
      %vm285 = vcmp.gt.f32.partialorder %v284, 1.0
      %v286 = vsel %vm285, 1, 0
      %v287 = vcvt.s32.f32 %v286
      %v288 = vmul.f32 %v281, 0.5
      %289 = vst [vmem:[#allocation1] sm:$0xff] %v227
      %s290 = scalar_lea.vmem [#allocation1], 5
      %v291 = vld [vmem:[%s290] ss:$9 sm:$0xff]
      %v293 = vadd.f32 %v288, %v291
      %v294 = vmul.f32 %v284, 0.5
      %v295 = vadd.f32 %v294, %v293
      %v296 = vsub.f32 %v295, %v287
      %vm297 = vcmp.gt.f32.partialorder %v296, 1.0
      %v298 = vsel %vm297, 1, 0
      %v299 = vcvt.s32.f32 %v298
      %v300 = vmul.f32 %v293, 0.5
      %301 = vst [vmem:[#allocation1] sm:$0xff] %v227
      %s302 = scalar_lea.vmem [#allocation1], 6
      %v303 = vld [vmem:[%s302] ss:$9 sm:$0xff]
      %v305 = vadd.f32 %v300, %v303
      %v306 = vmul.f32 %v296, 0.5
      %v307 = vadd.f32 %v306, %v305
      %v308 = vsub.f32 %v307, %v299
      %vm309 = vcmp.gt.f32.partialorder %v308, 1.0
      %v310 = vsel %vm309, 1, 0
      %v311 = vcvt.s32.f32 %v310
      %v312 = vmul.f32 %v305, 0.5
      %313 = vst [vmem:[#allocation1] sm:$0xff] %v227
      %s314 = scalar_lea.vmem [#allocation1], 7
      %v315 = vld [vmem:[%s314] ss:$9 sm:$0xff]
      %v317 = vadd.f32 %v312, %v315
      %v318 = vmul.f32 %v308, 0.5
      %v319 = vadd.f32 %v318, %v317
      %v320 = vsub.f32 %v319, %v311
      %vm321 = vcmp.gt.f32.partialorder %v320, 1.0
      %v322 = vsel %vm321, 1, 0
      %v323 = vcvt.s32.f32 %v322
      %v325 = vperm.slane %v251, 0
      %v328 = vperm.slane %v263, 0
      %v331 = vperm.slane %v275, 0
      %v334 = vperm.slane %v287, 0
      %v337 = vperm.slane %v299, 0
      %v340 = vperm.slane %v311, 0
      %v343 = vperm.slane %v323, 0
      %vm345 = vcmask 1040384
      %v346 = vsel %vm345, %v238, %v325
      %vm347 = vcmask 1041408
      %v348 = vsel %vm347, %v346, %v328
      %vm349 = vcmask 1042432
      %v350 = vsel %vm349, %v348, %v331
      %vm351 = vcmask 1043456
      %v352 = vsel %vm351, %v350, %v334
      %vm353 = vcmask 1044480
      %v354 = vsel %vm353, %v352, %v337
      %vm355 = vcmask 1045504
      %v356 = vsel %vm355, %v354, %v340
      %vm357 = vcmask 1046528
      %v358 = vsel %vm357, %v356, %v343
      %359 = vst [vmem:[%s199] sm:$0xff] %v358
      %v361 = vperm.slane %v248, 0
      %v364 = vperm.slane %v260, 0
      %v367 = vperm.slane %v272, 0
      %v370 = vperm.slane %v284, 0
      %v373 = vperm.slane %v296, 0
      %v376 = vperm.slane %v308, 0
      %v379 = vperm.slane %v320, 0
      %v381 = vsel %vm345, %v235, %v361
      %v382 = vsel %vm347, %v381, %v364
      %v383 = vsel %vm349, %v382, %v367
      %v384 = vsel %vm351, %v383, %v370
      %v385 = vsel %vm353, %v384, %v373
      %v386 = vsel %vm355, %v385, %v376
      %v387 = vsel %vm357, %v386, %v379
      %388 = vst [vmem:[%s203] sm:$0xff] %v387
      %389 = vst [vmem:[#allocation2] sm:$0x1] %v317
      %390 = vst [vmem:[#allocation3] sm:$0x1] %v320
      %p391 = scmp.lt.s32.totalorder %s16, 2
      %s392 = scalar_select %p391, %s16, 2
      %s393 = smul.addr %s392, 8
      %s394 = scalar_lea.vmem %s3, %s393
      %p395 = scmp.lt.s32.totalorder %s16, 2
      %s396 = scalar_select %p395, %s16, 2
      %s397 = smul.addr %s396, 8
      %s398 = scalar_lea.vmem %s4, %s397
      // Predicated region
      $region37: #{net_forward.1} parent=31 // pred_check
        %p399 = pneg %p102
      $region38: #{net_forward.1} parent=31 // pred_check_branch
        %401 = sbr.rel (%p399) target = $region40
      $region39: #{net_forward.1} parent=31 // pred_region
        _
      $region40: #{net_forward.1} parent=31 // pred_fallthru
        _
      // Predicated region
      $region41: #{net_forward.1} parent=31 // pred_check
        %p402 = pneg %p128
      $region42: #{net_forward.1} parent=31 // pred_check_branch
        %404 = sbr.rel (%p402) target = $region44
      $region43: #{net_forward.1} parent=31 // pred_region
        _
      $region44: #{net_forward.1} parent=31 // pred_fallthru
        _
    $region32: #{net_forward.1} parent=5 // pred_fallthru
      _
    %p405 = scmp.le.s32.totalorder 2, %s11
    // Predicated region
    $region45: #{net_forward.1} parent=5 // pred_check
      %p406 = pneg %p405
    $region46: #{net_forward.1} parent=5 // pred_check_branch
      %408 = sbr.rel (%p406) target = $region48
    $region47: #{net_forward.1} parent=5 // pred_region
      %s409 = ssub.s32 %s11, 2
      // Predicated region
      $region49: #{net_forward.1} parent=47 // pred_check
        %p410 = pneg %p108
      $region50: #{net_forward.1} parent=47 // pred_check_branch
        %412 = sbr.rel (%p410) target = $region52
      $region51: #{net_forward.1} parent=47 // pred_region
        %p413 = scmp.lt.s32.totalorder %s17, 2
        %s414 = scalar_select %p413, %s17, 2
        %s415 = smul.addr %s414, 8
        %s416 = scalar_lea.vmem %s3, %s415
      $region52: #{net_forward.1} parent=47 // pred_fallthru
        _
      // Predicated region
      $region53: #{net_forward.1} parent=47 // pred_check
        %p417 = pneg %p134
      $region54: #{net_forward.1} parent=47 // pred_check_branch
        %419 = sbr.rel (%p417) target = $region56
      $region55: #{net_forward.1} parent=47 // pred_region
        %p420 = scmp.lt.s32.totalorder %s17, 2
        %s421 = scalar_select %p420, %s17, 2
        %s422 = smul.addr %s421, 8
        %s423 = scalar_lea.vmem %s4, %s422
      $region56: #{net_forward.1} parent=47 // pred_fallthru
        _
    $region48: #{net_forward.1} parent=5 // pred_fallthru
      _
  $region6: #{net_forward.1} parent=0 // loop_footer
    %s15 = sadd.s32 1, %s11
  $region7: #{net_forward.1} parent=0 // loop_footer_branch
    %10 = sbr.rel target = $region3
  $region8: #{net_forward.1} parent=0 // loop_exit
    _

</llo_original>
